<compile_context>
chip_gen: v7x
topology: tpu7x:2x2x1
jax: 0.10.0
libtpu: 0.0.40
codegen_flags: <defaults>
</compile_context>

<pallas_src>
import jax
import jax.numpy as jnp
from jax.experimental import pallas as pl
from jax.experimental.pallas import tpu as pltpu


def _ru(n, m):
    return ((n + m - 1) // m) * m


# ----------------------------------------------------------------------------
# Fused PALayer kernel: conv1x1 -> ReLU -> conv1x1 -> sigmoid -> x * y
# ----------------------------------------------------------------------------

def _palayer_kernel(x_ref, w1_ref, b1_ref, w2_ref, b2_ref, o_ref):
    x = x_ref[0]                                                  # (C, THW) f32
    # conv1 (1x1): contract channels on the MXU (bf16 operands, f32 acc).
    h = jnp.dot(w1_ref[...], x.astype(jnp.bfloat16),
                preferred_element_type=jnp.float32) + b1_ref[...]  # (HP, THW)
    h = jnp.maximum(h, 0.0)
    # conv2 (1x1): single attention logit per pixel, (1, THW).
    a = jnp.dot(w2_ref[...], h.astype(jnp.bfloat16),
                preferred_element_type=jnp.float32) + b2_ref[...]  # (1, THW)
    # sigmoid (EUP) + broadcast over channels along sublanes + final multiply.
    o_ref[0] = x * jax.nn.sigmoid(a)                               # (C, THW)


# ----------------------------------------------------------------------------
# Host-side wrappers
# ----------------------------------------------------------------------------

def pack_params(params, channel):
    """One-time weight packing: bf16 weights, Cmid padded to a sublane multiple."""
    C = channel
    Cmid = params["w1"].shape[0]
    HP = _ru(Cmid, 8)
    w1 = params["w1"].reshape(Cmid, C)               # Conv2d weight (Cout, Cin, 1, 1)
    w2 = params["w2"].reshape(1, Cmid)               # (1, Cmid, 1, 1) -> (1, Cmid)
    w1_p = (jnp.zeros((HP, C), jnp.bfloat16)
            .at[:Cmid, :].set(w1.astype(jnp.bfloat16)))
    b1_p = (jnp.zeros((HP, 1), jnp.float32)
            .at[:Cmid, 0].set(params["b1"].astype(jnp.float32)))
    w2_p = (jnp.zeros((1, HP), jnp.bfloat16)
            .at[0, :Cmid].set(w2[0].astype(jnp.bfloat16)))
    b2_p = params["b2"].reshape(1, 1).astype(jnp.float32)
    return {"w1": w1_p, "b1": b1_p, "w2": w2_p, "b2": b2_p}


def palayer_forward(packed, x_nchw, *, thw=2048):
    N, C, H, W = x_nchw.shape
    HW = H * W
    x3 = x_nchw.reshape(N, C, HW).astype(jnp.float32)   # free reshape, no transpose

    THW = min(thw, _ru(HW, 128))
    HWp = _ru(HW, THW)
    if HWp != HW:                                        # static; no-op for demo shapes
        x3 = jnp.pad(x3, ((0, 0), (0, 0), (0, HWp - HW)))

    w1_p, b1_p = packed["w1"], packed["b1"]
    w2_p, b2_p = packed["w2"], packed["b2"]
    HP = w1_p.shape[0]

    out = pl.pallas_call(
        _palayer_kernel,
        out_shape=jax.ShapeDtypeStruct((N, C, HWp), jnp.float32),
        grid=(N, HWp // THW),
        in_specs=[
            pl.BlockSpec((1, C, THW), lambda n, j: (n, 0, j)),  # x tile
            pl.BlockSpec((HP, C), lambda n, j: (0, 0)),         # w1 (resident, bf16)
            pl.BlockSpec((HP, 1), lambda n, j: (0, 0)),         # b1
            pl.BlockSpec((1, HP), lambda n, j: (0, 0)),         # w2 (bf16)
            pl.BlockSpec((1, 1), lambda n, j: (0, 0)),          # b2
        ],
        out_specs=pl.BlockSpec((1, C, THW), lambda n, j: (n, 0, j)),
        compiler_params=pltpu.CompilerParams(
            dimension_semantics=("parallel", "parallel"),
        ),
    )(x3, w1_p, b1_p, w2_p, b2_p)

    return out[:, :, :HW].reshape(N, C, H, W)


def palayer_reference(params, x):
    """Pure-JAX NCHW reference of the PyTorch PALayer (f32)."""
    C = x.shape[1]
    Cmid = params["w1"].shape[0]
    w1 = params["w1"].reshape(Cmid, C)
    w2 = params["w2"].reshape(1, Cmid)
    h = jnp.einsum("nchw,kc->nkhw", x, w1) + params["b1"][None, :, None, None]
    h = jnp.maximum(h, 0.0)
    a = jnp.einsum("nkhw,ok->nohw", h, w2) + params["b2"][None, :, None, None]
    return x * jax.nn.sigmoid(a)


# ----------------------------------------------------------------------------
# Main
# ----------------------------------------------------------------------------

if __name__ == "__main__":
    key = jax.random.PRNGKey(0)
    k1, k2, k3, k4, kx = jax.random.split(key, 5)

    channel = 64                       # PALayer requires channel // 8 >= 1
    cmid = channel // 8
    params = {
        "w1": 0.1 * jax.random.normal(k1, (cmid, channel, 1, 1), jnp.float32),
        "b1": 0.1 * jax.random.normal(k2, (cmid,), jnp.float32),
        "w2": 0.1 * jax.random.normal(k3, (1, cmid, 1, 1), jnp.float32),
        "b2": 0.1 * jax.random.normal(k4, (1,), jnp.float32),
    }
    x = jax.random.normal(kx, (2, channel, 16, 16), jnp.float32)

    packed = pack_params(params, channel)      # one-time bf16/padded packing
    fwd = jax.jit(palayer_forward)
    out = jax.block_until_ready(fwd(packed, x))

    ref = palayer_reference(params, x)
    assert out.shape == x.shape, out.shape
    assert bool(jnp.all(jnp.isfinite(out)))
    max_err = float(jnp.max(jnp.abs(out - ref)))
    assert max_err < 5e-2, max_err               # bf16-operand tolerance
    print("KERNEL_OK")
</pallas_src>

<mosaic_0001>
module attributes {stable_mosaic.version = 11 : i64} {
  func.func @_palayer_kernel(%arg0: i32, %arg1: i32, %arg2: memref<1x64x256xf32, #tpu.memory_space<vmem>>, %arg3: memref<8x64xbf16, #tpu.memory_space<vmem>>, %arg4: memref<8x1xf32, #tpu.memory_space<vmem>>, %arg5: memref<1x8xbf16, #tpu.memory_space<vmem>>, %arg6: memref<1x1xf32, #tpu.memory_space<vmem>>, %arg7: memref<1x64x256xf32, #tpu.memory_space<vmem>>) attributes {dimension_semantics = [#tpu.dimension_semantics<parallel>, #tpu.dimension_semantics<parallel>], iteration_bounds = array<i64: 2, 1>, scalar_prefetch = 0 : i64, scratch_operands = 0 : i64, tpu.core_type = #tpu.core_type<tc>, window_params = [{transform_indices = @transform_0, window_bounds = array<i64: 1, 64, 256>}, {pipeline_mode = #tpu.pipeline_mode<synchronous>, transform_indices = @transform_1, window_bounds = array<i64: 8, 64>}, {pipeline_mode = #tpu.pipeline_mode<synchronous>, transform_indices = @transform_2, window_bounds = array<i64: 8, 1>}, {pipeline_mode = #tpu.pipeline_mode<synchronous>, transform_indices = @transform_3, window_bounds = array<i64: 1, 8>}, {pipeline_mode = #tpu.pipeline_mode<synchronous>, transform_indices = @transform_4, window_bounds = array<i64: 1, 1>}, {transform_indices = @transform_5, window_bounds = array<i64: 1, 64, 256>}]} {
    %c0 = arith.constant 0 : index
    %c0_0 = arith.constant 0 : index
    %c0_1 = arith.constant 0 : index
    %0 = vector.load %arg2[%c0, %c0_0, %c0_1] : memref<1x64x256xf32, #tpu.memory_space<vmem>>, vector<1x64x256xf32>
    %1 = vector.shape_cast %0 : vector<1x64x256xf32> to vector<64x256xf32>
    %c0_2 = arith.constant 0 : index
    %c0_3 = arith.constant 0 : index
    %2 = vector.load %arg3[%c0_2, %c0_3] : memref<8x64xbf16, #tpu.memory_space<vmem>>, vector<8x64xbf16>
    %3 = arith.truncf %1 : vector<64x256xf32> to vector<64x256xbf16>
    %cst = arith.constant dense<0.000000e+00> : vector<8x256xf32>
    %4 = tpu.matmul %2, %3, %cst {dimension_numbers = #tpu.dot_dimension_numbers<[1], [0], [0], [1], [0, 0, 1, 1], [], []>} : vector<8x64xbf16>, vector<64x256xbf16>, vector<8x256xf32> -> vector<8x256xf32>
    %c0_4 = arith.constant 0 : index
    %c0_5 = arith.constant 0 : index
    %5 = vector.load %arg4[%c0_4, %c0_5] : memref<8x1xf32, #tpu.memory_space<vmem>>, vector<8x1xf32>
    %6 = vector.broadcast %5 : vector<8x1xf32> to vector<8x256xf32>
    %7 = arith.addf %4, %6 : vector<8x256xf32>
    %cst_6 = arith.constant 0.000000e+00 : f32
    %8 = vector.broadcast %cst_6 : f32 to vector<8x256xf32>
    %9 = arith.maximumf %7, %8 : vector<8x256xf32>
    %c0_7 = arith.constant 0 : index
    %c0_8 = arith.constant 0 : index
    %10 = vector.load %arg5[%c0_7, %c0_8] : memref<1x8xbf16, #tpu.memory_space<vmem>>, vector<1x8xbf16>
    %11 = arith.truncf %9 : vector<8x256xf32> to vector<8x256xbf16>
    %cst_9 = arith.constant dense<0.000000e+00> : vector<1x256xf32>
    %12 = tpu.matmul %10, %11, %cst_9 {dimension_numbers = #tpu.dot_dimension_numbers<[1], [0], [0], [1], [0, 0, 1, 1], [], []>} : vector<1x8xbf16>, vector<8x256xbf16>, vector<1x256xf32> -> vector<1x256xf32>
    %c0_10 = arith.constant 0 : index
    %c0_11 = arith.constant 0 : index
    %13 = vector.load %arg6[%c0_10, %c0_11] : memref<1x1xf32, #tpu.memory_space<vmem>>, vector<1x1xf32>
    %14 = vector.broadcast %13 : vector<1x1xf32> to vector<1x256xf32>
    %15 = arith.addf %12, %14 : vector<1x256xf32>
    %16 = arith.negf %15 : vector<1x256xf32>
    %17 = math.exp %16 : vector<1x256xf32>
    %cst_12 = arith.constant 1.000000e+00 : f32
    %18 = vector.broadcast %cst_12 : f32 to vector<1x256xf32>
    %19 = arith.addf %18, %17 : vector<1x256xf32>
    %20 = arith.divf %18, %19 : vector<1x256xf32>
    %21 = vector.broadcast %20 : vector<1x256xf32> to vector<64x256xf32>
    %22 = arith.mulf %1, %21 : vector<64x256xf32>
    %c0_13 = arith.constant 0 : index
    %c0_14 = arith.constant 0 : index
    %c0_15 = arith.constant 0 : index
    %23 = vector.load %arg7[%c0_13, %c0_14, %c0_15] : memref<1x64x256xf32, #tpu.memory_space<vmem>>, vector<1x64x256xf32>
    %24 = vector.shape_cast %23 : vector<1x64x256xf32> to vector<64x256xf32>
    %25 = vector.shape_cast %22 : vector<64x256xf32> to vector<1x64x256xf32>
    tpu.vector_store %arg7[%c0_13, %c0_14, %c0_15], %25 {strides = array<i32>} : memref<1x64x256xf32, #tpu.memory_space<vmem>>, vector<1x64x256xf32>,
    return
  }
  func.func @transform_0(%arg0: i32, %arg1: i32) -> (i32, i32, i32) {
    %c0_i32 = arith.constant 0 : i32
    %c0_i32_0 = arith.constant 0 : i32
    return %arg0, %c0_i32, %arg1 : i32, i32, i32
  }
  func.func @transform_1(%arg0: i32, %arg1: i32) -> (i32, i32) {
    %c0_i32 = arith.constant 0 : i32
    %c0_i32_0 = arith.constant 0 : i32
    %c0_i32_1 = arith.constant 0 : i32
    return %c0_i32, %c0_i32_0 : i32, i32
  }
  func.func @transform_2(%arg0: i32, %arg1: i32) -> (i32, i32) {
    %c0_i32 = arith.constant 0 : i32
    %c0_i32_0 = arith.constant 0 : i32
    %c0_i32_1 = arith.constant 0 : i32
    return %c0_i32, %c0_i32_0 : i32, i32
  }
  func.func @transform_3(%arg0: i32, %arg1: i32) -> (i32, i32) {
    %c0_i32 = arith.constant 0 : i32
    %c0_i32_0 = arith.constant 0 : i32
    %c0_i32_1 = arith.constant 0 : i32
    return %c0_i32, %c0_i32_0 : i32, i32
  }
  func.func @transform_4(%arg0: i32, %arg1: i32) -> (i32, i32) {
    %c0_i32 = arith.constant 0 : i32
    %c0_i32_0 = arith.constant 0 : i32
    %c0_i32_1 = arith.constant 0 : i32
    return %c0_i32, %c0_i32_0 : i32, i32
  }
  func.func @transform_5(%arg0: i32, %arg1: i32) -> (i32, i32, i32) {
    %c0_i32 = arith.constant 0 : i32
    %c0_i32_0 = arith.constant 0 : i32
    return %arg0, %c0_i32, %arg1 : i32, i32, i32
  }
}

</mosaic_0001>

<llo_original>
// kernel: palayer_forward.1
$region0: #{palayer_forward.1}
  #allocation0 [shape = 'u32[]', space=smem, size = 0x4, offset = 0x4, fixed_abs, tag = 'smem constant byte address 0x4 - core index']
  #allocation1 [shape = 'u32[144,128]{1,0:T(1,128)}', space=vmem, size = 0x12000, scoped, tag = 'internal scratch']
  #allocation2 [shape = 'f32[1,1]{1,0:T(1,128)S(1)}', space=vmem, size = 0x200, scoped, tag = 'scoped memory for palayer_forward.1']
  %s0 = inlined_call_operand.vmem [shape: f32[2,64,256], index: 0, kind: input, shape index: {}]
  %s1 = inlined_call_operand.vmem [shape: bf16[8,64], index: 1, kind: input, shape index: {}]
  %s2 = inlined_call_operand.vmem [shape: f32[8,1], index: 2, kind: input, shape index: {}]
  %s3 = inlined_call_operand.vmem [shape: bf16[1,8], index: 3, kind: input, shape index: {}]
  %s4 = inlined_call_operand.<no memory space> [shape: f32[1,1], index: 4, kind: input, shape index: {}]
  %s5 = inlined_call_operand.vmem [shape: f32[2,64,256], index: 5, kind: output, shape index: {}]
  %s6 = sld [smem:[#allocation0]]
  $region53: #{palayer_forward.1} parent=0
    _
  %s8 = ssub.s32 1, %s6
  %s9 = scalar_select 0, %s8, %s6
  %v10 = vstv %s4
  %11 = vst [vmem:[#allocation2] sm:$0x1] %v10
  loop: start=0, step=1, limit=4
  $region2: #{palayer_forward.1} parent=0 // loop_pre_header
    _
  $region3: #{palayer_forward.1} parent=0 // loop_header
    %s13 = sphi 0, %s17
    %p14 = scmp.ge.s32.totalorder %s13, 4
    %s20 = sphi 0, %s32
    %s21 = sphi 0, %s28
    %s22 = sphi 0, %s20
    %s23 = sphi 0, %s21
    %s24 = sphi 0, %s22
    %s25 = sphi 0, %s23
    %s37 = sphi 0, %s39
    %s40 = sphi 0, %s37
    %s41 = sphi 0, %s40
    %s57 = sphi 0, %s41
    %s61 = sphi 0, %s61
    %s63 = sphi 0, %s61
    %s64 = sphi 0, %s63
    %s78 = sphi 0, %s64
    %s82 = sphi 0, %s82
    %s84 = sphi 0, %s82
    %s85 = sphi 0, %s84
    %s99 = sphi 0, %s85
    %s103 = sphi 0, %s103
    %s105 = sphi 0, %s103
    %s106 = sphi 0, %s105
    %s120 = sphi 0, %s106
    %s124 = sphi 0, %s124
    %s126 = sphi 0, %s124
    %s127 = sphi 0, %s126
    %s141 = sphi 0, %s127
    %s149 = sphi 0, %s151
    %s152 = sphi 0, %s149
    %s153 = sphi 0, %s152
    %s169 = sphi 0, %s153
  $region4: #{palayer_forward.1} parent=0 // loop_header_branch
    %16 = sbr.rel (%p14) target = $region8
  $region5: #{palayer_forward.1} parent=0 // loop_body
    %s18 = ssub.s32 %s13, 1
    %s19 = ssub.s32 %s13, 2
    %s26 = sadd.s32 1, %s21
    %p27 = scmp.ge.s32.totalorder %s26, 1
    %s28 = scalar_select %p27, 0, %s26
    %s29 = sadd.s32 1, %s20
    %s30 = scalar_select %p27, %s29, %s20
    %p31 = scmp.ge.s32.totalorder %s30, 2
    %s32 = scalar_select %p31, 0, %s30
    %s33 = ssub.s32 %s20, %s32
    %s34 = ssub.s32 %s21, %s28
    %s35 = sor.u32 %s33, %s34
    %p36 = scmp.eq.s32.totalorder %s35, 0
    %s38 = sadd.s32 %s37, 1
    %s39 = scalar_select %p36, %s37, %s38
    %p42 = pneg %p36
    %p43 = scmp.eq.s32.totalorder %s13, 1
    %p44 = por %p42, %p43
    %p45 = scmp.ne.s32.totalorder %s37, %s40
    %p46 = scmp.eq.s32.totalorder %s13, 0
    %p47 = por %p45, %p46
    %p48 = scmp.ne.s32.totalorder %s37, %s40
    %p49 = scmp.eq.s32.totalorder %s18, 1
    %p50 = por %p48, %p49
    %p51 = scmp.ne.s32.totalorder %s40, %s41
    %p52 = scmp.eq.s32.totalorder %s18, 0
    %p53 = por %p51, %p52
    %p54 = scmp.ne.s32.totalorder %s40, %s41
    %p55 = scmp.eq.s32.totalorder %s19, 1
    %p56 = por %p54, %p55
    %p58 = scmp.ne.s32.totalorder %s41, %s57
    %p59 = scmp.eq.s32.totalorder %s19, 0
    %p60 = por %p58, %p59
    %s62 = sadd.s32 %s61, 1
    %p65 = scmp.eq.s32.totalorder %s13, 1
    %p66 = scmp.ne.s32.totalorder %s61, %s63
    %p67 = scmp.eq.s32.totalorder %s13, 0
    %p68 = por %p66, %p67
    %p69 = scmp.ne.s32.totalorder %s61, %s63
    %p70 = scmp.eq.s32.totalorder %s18, 1
    %p71 = por %p69, %p70
    %p72 = scmp.ne.s32.totalorder %s63, %s64
    %p73 = scmp.eq.s32.totalorder %s18, 0
    %p74 = por %p72, %p73
    %p75 = scmp.ne.s32.totalorder %s63, %s64
    %p76 = scmp.eq.s32.totalorder %s19, 1
    %p77 = por %p75, %p76
    %p79 = scmp.ne.s32.totalorder %s64, %s78
    %p80 = scmp.eq.s32.totalorder %s19, 0
    %p81 = por %p79, %p80
    %s83 = sadd.s32 %s82, 1
    %p86 = scmp.eq.s32.totalorder %s13, 1
    %p87 = scmp.ne.s32.totalorder %s82, %s84
    %p88 = scmp.eq.s32.totalorder %s13, 0
    %p89 = por %p87, %p88
    %p90 = scmp.ne.s32.totalorder %s82, %s84
    %p91 = scmp.eq.s32.totalorder %s18, 1
    %p92 = por %p90, %p91
    %p93 = scmp.ne.s32.totalorder %s84, %s85
    %p94 = scmp.eq.s32.totalorder %s18, 0
    %p95 = por %p93, %p94
    %p96 = scmp.ne.s32.totalorder %s84, %s85
    %p97 = scmp.eq.s32.totalorder %s19, 1
    %p98 = por %p96, %p97
    %p100 = scmp.ne.s32.totalorder %s85, %s99
    %p101 = scmp.eq.s32.totalorder %s19, 0
    %p102 = por %p100, %p101
    %s104 = sadd.s32 %s103, 1
    %p107 = scmp.eq.s32.totalorder %s13, 1
    %p108 = scmp.ne.s32.totalorder %s103, %s105
    %p109 = scmp.eq.s32.totalorder %s13, 0
    %p110 = por %p108, %p109
    %p111 = scmp.ne.s32.totalorder %s103, %s105
    %p112 = scmp.eq.s32.totalorder %s18, 1
    %p113 = por %p111, %p112
    %p114 = scmp.ne.s32.totalorder %s105, %s106
    %p115 = scmp.eq.s32.totalorder %s18, 0
    %p116 = por %p114, %p115
    %p117 = scmp.ne.s32.totalorder %s105, %s106
    %p118 = scmp.eq.s32.totalorder %s19, 1
    %p119 = por %p117, %p118
    %p121 = scmp.ne.s32.totalorder %s106, %s120
    %p122 = scmp.eq.s32.totalorder %s19, 0
    %p123 = por %p121, %p122
    %s125 = sadd.s32 %s124, 1
    %p128 = scmp.eq.s32.totalorder %s13, 1
    %p129 = scmp.ne.s32.totalorder %s124, %s126
    %p130 = scmp.eq.s32.totalorder %s13, 0
    %p131 = por %p129, %p130
    %p132 = scmp.ne.s32.totalorder %s124, %s126
    %p133 = scmp.eq.s32.totalorder %s18, 1
    %p134 = por %p132, %p133
    %p135 = scmp.ne.s32.totalorder %s126, %s127
    %p136 = scmp.eq.s32.totalorder %s18, 0
    %p137 = por %p135, %p136
    %p138 = scmp.ne.s32.totalorder %s126, %s127
    %p139 = scmp.eq.s32.totalorder %s19, 1
    %p140 = por %p138, %p139
    %p142 = scmp.ne.s32.totalorder %s127, %s141
    %p143 = scmp.eq.s32.totalorder %s19, 0
    %p144 = por %p142, %p143
    %s145 = ssub.s32 %s20, %s32
    %s146 = ssub.s32 %s21, %s28
    %s147 = sor.u32 %s145, %s146
    %p148 = scmp.eq.s32.totalorder %s147, 0
    %s150 = sadd.s32 %s149, 1
    %s151 = scalar_select %p148, %s149, %s150
    %p154 = pneg %p148
    %p155 = scmp.eq.s32.totalorder %s13, 1
    %p156 = por %p154, %p155
    %p157 = scmp.ne.s32.totalorder %s149, %s152
    %p158 = scmp.eq.s32.totalorder %s13, 0
    %p159 = por %p157, %p158
    %p160 = scmp.ne.s32.totalorder %s149, %s152
    %p161 = scmp.eq.s32.totalorder %s18, 1
    %p162 = por %p160, %p161
    %p163 = scmp.ne.s32.totalorder %s152, %s153
    %p164 = scmp.eq.s32.totalorder %s18, 0
    %p165 = por %p163, %p164
    %p166 = scmp.ne.s32.totalorder %s152, %s153
    %p167 = scmp.eq.s32.totalorder %s19, 1
    %p168 = por %p166, %p167
    %p170 = scmp.ne.s32.totalorder %s153, %s169
    %p171 = scmp.eq.s32.totalorder %s19, 0
    %p172 = por %p170, %p171
    %p173 = scmp.le.s32.totalorder 1, %s13
    %p174 = scmp.lt.s32.totalorder %s13, 3
    %p175 = pnand %p173, %p174
    %p176 = pneg %p175
    // Predicated region
    $region9: #{palayer_forward.1} parent=5 // pred_check
      _
    $region10: #{palayer_forward.1} parent=5 // pred_check_branch
      %178 = sbr.rel (%p175) target = $region12
    $region11: #{palayer_forward.1} parent=5 // pred_region
      %s179 = ssub.s32 %s13, 1
      // Predicated region
      $region13: #{palayer_forward.1} parent=11 // pred_check
        %p180 = pneg %p74
      $region14: #{palayer_forward.1} parent=11 // pred_check_branch
        %182 = sbr.rel (%p180) target = $region16
      $region15: #{palayer_forward.1} parent=11 // pred_region
        _
      $region16: #{palayer_forward.1} parent=11 // pred_fallthru
        _
      // Predicated region
      $region17: #{palayer_forward.1} parent=11 // pred_check
        %p183 = pneg %p95
      $region18: #{palayer_forward.1} parent=11 // pred_check_branch
        %185 = sbr.rel (%p183) target = $region20
      $region19: #{palayer_forward.1} parent=11 // pred_region
        _
      $region20: #{palayer_forward.1} parent=11 // pred_fallthru
        _
      // Predicated region
      $region21: #{palayer_forward.1} parent=11 // pred_check
        %p186 = pneg %p116
      $region22: #{palayer_forward.1} parent=11 // pred_check_branch
        %188 = sbr.rel (%p186) target = $region24
      $region23: #{palayer_forward.1} parent=11 // pred_region
        _
      $region24: #{palayer_forward.1} parent=11 // pred_fallthru
        _
      // Predicated region
      $region25: #{palayer_forward.1} parent=11 // pred_check
        %p189 = pneg %p137
      $region26: #{palayer_forward.1} parent=11 // pred_check_branch
        %191 = sbr.rel (%p189) target = $region28
      $region27: #{palayer_forward.1} parent=11 // pred_region
        _
      $region28: #{palayer_forward.1} parent=11 // pred_fallthru
        _
    $region12: #{palayer_forward.1} parent=5 // pred_fallthru
      _
    %p192 = scmp.lt.s32.totalorder %s13, 2
    // Predicated region
    $region29: #{palayer_forward.1} parent=5 // pred_check
      %p193 = pneg %p192
    $region30: #{palayer_forward.1} parent=5 // pred_check_branch
      %195 = sbr.rel (%p193) target = $region32
    $region31: #{palayer_forward.1} parent=5 // pred_region
      // Predicated region
      $region33: #{palayer_forward.1} parent=31 // pred_check
        %p196 = pneg %p47
      $region34: #{palayer_forward.1} parent=31 // pred_check_branch
        %198 = sbr.rel (%p196) target = $region36
      $region35: #{palayer_forward.1} parent=31 // pred_region
        %s199 = smul.u32 2, %s21
        %p200 = scmp.lt.s32.totalorder %s20, 1
        %s201 = scalar_select %p200, %s20, 1
        %p202 = scmp.lt.s32.totalorder %s199, 1
        %s203 = scalar_select %p202, %s199, 1
        %s204 = smul.addr %s201, 16
        %s205 = sadd.s32 %s203, %s204
        %s206 = smul.addr %s205, 8
        %s207 = scalar_lea.vmem %s0, %s206
        %s208 = smul.u32 2, %s21
      $region36: #{palayer_forward.1} parent=31 // pred_fallthru
        _
    $region32: #{palayer_forward.1} parent=5 // pred_fallthru
      _
    %p209 = scmp.le.s32.totalorder 1, %s13
    %p210 = scmp.lt.s32.totalorder %s13, 3
    %p211 = pnand %p209, %p210
    %p212 = pneg %p211
    // Predicated region
    $region37: #{palayer_forward.1} parent=5 // pred_check
      _
    $region38: #{palayer_forward.1} parent=5 // pred_check_branch
      %214 = sbr.rel (%p211) target = $region40
    $region39: #{palayer_forward.1} parent=5 // pred_region
      %s215 = ssub.s32 %s13, 1
      %s216 = smul.u32 2, %s23
      %p217 = scmp.lt.s32.totalorder %s22, 1
      %s218 = scalar_select %p217, %s22, 1
      %p219 = scmp.lt.s32.totalorder %s216, 1
      %s220 = scalar_select %p219, %s216, 1
      %s221 = smul.addr %s218, 16
      %s222 = sadd.s32 %s220, %s221
      %s223 = smul.addr %s222, 8
      %s224 = scalar_lea.vmem %s0, %s223
      %p225 = pneg %p53
      %p226 = pneg %p50
      %p227 = pneg %p74
      %p228 = pneg %p71
      %p229 = pneg %p95
      %p230 = pneg %p92
      %p231 = pneg %p116
      %p232 = pneg %p113
      %p233 = pneg %p137
      %p234 = pneg %p134
      %p235 = pneg %p165
      %p236 = pneg %p162
      %s237 = smul.u32 2, %s23
      %p238 = scmp.lt.s32.totalorder %s22, 1
      %s239 = scalar_select %p238, %s22, 1
      %p240 = scmp.lt.s32.totalorder %s237, 1
      %s241 = scalar_select %p240, %s237, 1
      %s242 = smul.addr %s239, 16
      %s243 = sadd.s32 %s241, %s242
      %s244 = smul.addr %s243, 8
      %s245 = scalar_lea.vmem %s5, %s244
      %s246 = smul.u32 2, %s23
      %p247 = scmp.lt.s32.totalorder %s22, 1
      %s248 = scalar_select %p247, %s22, 1
      %p249 = scmp.lt.s32.totalorder %s246, 1
      %s250 = scalar_select %p249, %s246, 1
      %s251 = smul.addr %s248, 16
      %s252 = sadd.s32 %s250, %s251
      %s253 = smul.addr %s252, 8
      %s254 = scalar_lea.vmem %s0, %s253
      %s255 = smul.u32 2, %s23
      %s256 = smul.u32 2, %s23
      %p257 = scmp.lt.s32.totalorder %s22, 1
      %s258 = scalar_select %p257, %s22, 1
      %p259 = scmp.lt.s32.totalorder %s256, 1
      %s260 = scalar_select %p259, %s256, 1
      %s261 = smul.addr %s258, 16
      %s262 = sadd.s32 %s260, %s261
      %s263 = smul.addr %s262, 8
      %s264 = scalar_lea.vmem %s5, %s263
      %s265 = smul.u32 2, %s23
      %v267 = vld [vmem:[%s254] sm:$0xff]
      %v268 = vld [vmem:[%s254 + $0x8] sm:$0xff]
      %v269 = vld [vmem:[%s254 + $0x10] sm:$0xff]
      %v270 = vld [vmem:[%s254 + $0x18] sm:$0xff]
      %v271 = vld [vmem:[%s254 + $0x20] sm:$0xff]
      %v272 = vld [vmem:[%s254 + $0x28] sm:$0xff]
      %v273 = vld [vmem:[%s254 + $0x30] sm:$0xff]
      %v274 = vld [vmem:[%s254 + $0x38] sm:$0xff]
      %v275 = vld [vmem:[%s254 + $0x40] sm:$0xff]
      %v276 = vld [vmem:[%s254 + $0x48] sm:$0xff]
      %v277 = vld [vmem:[%s254 + $0x50] sm:$0xff]
      %v278 = vld [vmem:[%s254 + $0x58] sm:$0xff]
      %v279 = vld [vmem:[%s254 + $0x60] sm:$0xff]
      %v280 = vld [vmem:[%s254 + $0x68] sm:$0xff]
      %v281 = vld [vmem:[%s254 + $0x70] sm:$0xff]
      %v282 = vld [vmem:[%s254 + $0x78] sm:$0xff]
      %v283 = vld [vmem:[%s1] sm:$0xf]
      %v284 = vpack.c.bf16 %v269, %v267
      %v285 = vpack.c.bf16 %v270, %v268
      %v286 = vpack.c.bf16 %v273, %v271
      %v287 = vpack.c.bf16 %v274, %v272
      %v288 = vpack.c.bf16 %v277, %v275
      %v289 = vpack.c.bf16 %v278, %v276
      %v290 = vpack.c.bf16 %v281, %v279
      %v291 = vpack.c.bf16 %v282, %v280
      %v292 = vld [vmem:[%s2] sm:$0xff]
      %294 = vset.pattern.permute.xlu0 0
      %295 = vperm.xlu0 %294, %v292
      %v296 = vpop.permute.xlu0 %295
      %vm298 = vcmask 523264
      %v300 = vsel %vm298, %v283, 0
      %302 = vmatprep.subr.bf16.mxu0 %v285
      %303 = vmatpush1.bf16.msra.mxu0 %v284
      %304 = vmatprep.subr.bf16.mxu0 %v287
      %305 = vmatpush1.bf16.msra.mxu0 %v286
      %306 = vmatprep.subr.bf16.mxu0 %v289
      %307 = vmatpush1.bf16.msra.mxu0 %v288
      %308 = vmatprep.subr.bf16.mxu0 %v291
      %309 = vmatpush1.bf16.msra.mxu0 %v290
      %310 = vmatprep.subr.bf16.mxu0 0
      %311 = vmatpush1.bf16.msra.mxu0 0
      %312 = vmatprep.subr.bf16.mxu0 0
      %313 = vmatpush1.bf16.msra.mxu0 0
      %314 = vmatprep.subr.bf16.mxu0 0
      %315 = vmatpush1.bf16.msra.mxu0 0
      %316 = vmatprep.subr.bf16.mxu0 0
      %317 = vmatpush1.bf16.msra.mxu0 0
      %318 = vmatprep.subr.bf16.mxu0 0
      %319 = vmatpush1.bf16.msra.mxu0 0
      %320 = vmatprep.subr.bf16.mxu0 0
      %321 = vmatpush1.bf16.msra.mxu0 0
      %322 = vmatprep.subr.bf16.mxu0 0
      %323 = vmatpush1.bf16.msra.mxu0 0
      %324 = vmatprep.subr.bf16.mxu0 0
      %325 = vmatpush1.bf16.msra.mxu0 0
      %326 = vmatprep.subr.bf16.mxu0 0
      %327 = vmatpush1.bf16.msra.mxu0 0
      %328 = vmatprep.subr.bf16.mxu0 0
      %329 = vmatpush1.bf16.msra.mxu0 0
      %330 = vmatprep.subr.bf16.mxu0 0
      %331 = vmatpush1.bf16.msra.mxu0 0
      %332 = vmatprep.subr.bf16.mxu0 0
      %333 = vmatpush1.bf16.msra.mxu0 0
      %334 = vmatprep.mubr.bf16.mxu0 0
      %335 = vmatmul.mubr.bf16.gmra.mrb[0].mxu0 %v300
      %v336 = vpop.f32.mrb[0].mxu0
      %v337 = vadd.f32 %v296, %v336
      %v338 = vpop.f32.mrb[0].mxu0
      %v339 = vadd.f32 %v296, %v338
      %v340 = vpop.f32.mrb[0].mxu0
      %v341 = vpop.f32.mrb[0].mxu0
      %342 = vdwg.mxu0
      %v343 = vmax.f32 %v337, 0.0
      %v344 = vmax.f32 %v339, 0.0
      %v345 = vld [vmem:[%s3] sm:$0x1]
      %v346 = vpack.c.bf16 %v343, %v343
      %v347 = vpack.c.bf16 %v344, %v344
      %v348 = vld [vmem:[#allocation2] sm:$0x1]
      %350 = vset.pattern.permute.xlu0 0
      %351 = vperm.xlu0 %350, %v348
      %v352 = vpop.permute.xlu0 %351
      %v354 = vlaneseq
      %v355 = vshrl.u32 %v354, 7
      %v356 = vsub.s32 0, %v355
      %v357 = vrot.slane %v352, %v356
      %vm358 = vcmask 64512
      %v360 = vsel %vm358, %v345, 0
      %vm362 = vcmask 1043456
      %v364 = vsel %vm362, %v346, 0
      %v367 = vsel %vm362, %v347, 0
      %369 = vmatprep.subr.bf16.mxu0 %v367
      %370 = vmatpush1.bf16.msra.mxu0 %v364
      %371 = vmatprep.subr.bf16.mxu0 0
      %372 = vmatpush1.bf16.msra.mxu0 0
      %373 = vmatprep.subr.bf16.mxu0 0
      %374 = vmatpush1.bf16.msra.mxu0 0
      %375 = vmatprep.subr.bf16.mxu0 0
      %376 = vmatpush1.bf16.msra.mxu0 0
      %377 = vmatprep.subr.bf16.mxu0 0
      %378 = vmatpush1.bf16.msra.mxu0 0
      %379 = vmatprep.subr.bf16.mxu0 0
      %380 = vmatpush1.bf16.msra.mxu0 0
      %381 = vmatprep.subr.bf16.mxu0 0
      %382 = vmatpush1.bf16.msra.mxu0 0
      %383 = vmatprep.subr.bf16.mxu0 0
      %384 = vmatpush1.bf16.msra.mxu0 0
      %385 = vmatprep.subr.bf16.mxu0 0
      %386 = vmatpush1.bf16.msra.mxu0 0
      %387 = vmatprep.subr.bf16.mxu0 0
      %388 = vmatpush1.bf16.msra.mxu0 0
      %389 = vmatprep.subr.bf16.mxu0 0
      %390 = vmatpush1.bf16.msra.mxu0 0
      %391 = vmatprep.subr.bf16.mxu0 0
      %392 = vmatpush1.bf16.msra.mxu0 0
      %393 = vmatprep.subr.bf16.mxu0 0
      %394 = vmatpush1.bf16.msra.mxu0 0
      %395 = vmatprep.subr.bf16.mxu0 0
      %396 = vmatpush1.bf16.msra.mxu0 0
      %397 = vmatprep.subr.bf16.mxu0 0
      %398 = vmatpush1.bf16.msra.mxu0 0
      %399 = vmatprep.subr.bf16.mxu0 0
      %400 = vmatpush1.bf16.msra.mxu0 0
      %401 = vmatprep.mubr.bf16.mxu0 0
      %402 = vmatmul.mubr.bf16.gmra.mrb[0].mxu0 %v360
      %v403 = vpop.f32.mrb[0].mxu0
      %v404 = vadd.f32 %v357, %v403
      %v405 = vpop.f32.mrb[0].mxu0
      %v406 = vadd.f32 %v357, %v405
      %v407 = vpop.f32.mrb[0].mxu0
      %v408 = vpop.f32.mrb[0].mxu0
      %409 = vdwg.mxu0
      %v410 = vxor.u32 %v404, 2147483648
      %v411 = vxor.u32 %v406, 2147483648
      %v412 = vmul.f32 %v410, 1.442695
      %v413 = vpow.pop %v412
      %v414 = vmul.f32 %v411, 1.442695
      %v415 = vpow.pop %v414
      %v416 = vadd.f32 %v413, 1.0
      %v417 = vadd.f32 %v415, 1.0
      %v418 = vrcp.pop %v416
      %v419 = vmul.f32 1.0, %v418
      %v420 = vrcp.pop %v417
      %v421 = vmul.f32 1.0, %v420
      %v422 = vlaneseq
      %v423 = vshrl.u32 %v422, 7
      %v424 = vsub.s32 0, %v423
      %v425 = vrot.slane %v419, %v424
      %v426 = vlaneseq
      %v427 = vshrl.u32 %v426, 7
      %v428 = vsub.s32 0, %v427
      %v429 = vrot.slane %v421, %v428
      %v430 = vmul.f32 %v267, %v425
      %v431 = vmul.f32 %v268, %v429
      %v432 = vmul.f32 %v269, %v425
      %v433 = vmul.f32 %v270, %v429
      %v434 = vmul.f32 %v271, %v425
      %v435 = vmul.f32 %v272, %v429
      %v436 = vmul.f32 %v273, %v425
      %v437 = vmul.f32 %v274, %v429
      %v438 = vmul.f32 %v275, %v425
      %v439 = vmul.f32 %v276, %v429
      %v440 = vmul.f32 %v277, %v425
      %v441 = vmul.f32 %v278, %v429
      %v442 = vmul.f32 %v279, %v425
      %v443 = vmul.f32 %v280, %v429
      %v444 = vmul.f32 %v281, %v425
      %v445 = vmul.f32 %v282, %v429
      %446 = vst [vmem:[%s264] sm:$0xff] %v430
      %447 = vst [vmem:[%s264 + $0x8] sm:$0xff] %v431
      %448 = vst [vmem:[%s264 + $0x10] sm:$0xff] %v432
      %449 = vst [vmem:[%s264 + $0x18] sm:$0xff] %v433
      %450 = vst [vmem:[%s264 + $0x20] sm:$0xff] %v434
      %451 = vst [vmem:[%s264 + $0x28] sm:$0xff] %v435
      %452 = vst [vmem:[%s264 + $0x30] sm:$0xff] %v436
      %453 = vst [vmem:[%s264 + $0x38] sm:$0xff] %v437
      %454 = vst [vmem:[%s264 + $0x40] sm:$0xff] %v438
      %455 = vst [vmem:[%s264 + $0x48] sm:$0xff] %v439
      %456 = vst [vmem:[%s264 + $0x50] sm:$0xff] %v440
      %457 = vst [vmem:[%s264 + $0x58] sm:$0xff] %v441
      %458 = vst [vmem:[%s264 + $0x60] sm:$0xff] %v442
      %459 = vst [vmem:[%s264 + $0x68] sm:$0xff] %v443
      %460 = vst [vmem:[%s264 + $0x70] sm:$0xff] %v444
      %461 = vst [vmem:[%s264 + $0x78] sm:$0xff] %v445
      %s462 = smul.u32 2, %s23
      %p463 = scmp.lt.s32.totalorder %s22, 1
      %s464 = scalar_select %p463, %s22, 1
      %p465 = scmp.lt.s32.totalorder %s462, 1
      %s466 = scalar_select %p465, %s462, 1
      %s467 = smul.addr %s464, 16
      %s468 = sadd.s32 %s466, %s467
      %s469 = smul.addr %s468, 8
      %s470 = scalar_lea.vmem %s5, %s469
      // Predicated region
      $region41: #{palayer_forward.1} parent=39 // pred_check
        %p471 = pneg %p162
      $region42: #{palayer_forward.1} parent=39 // pred_check_branch
        %473 = sbr.rel (%p471) target = $region44
      $region43: #{palayer_forward.1} parent=39 // pred_region
        %s474 = smul.u32 2, %s23
      $region44: #{palayer_forward.1} parent=39 // pred_fallthru
        _
    $region40: #{palayer_forward.1} parent=5 // pred_fallthru
      _
    %p475 = scmp.le.s32.totalorder 2, %s13
    // Predicated region
    $region45: #{palayer_forward.1} parent=5 // pred_check
      %p476 = pneg %p475
    $region46: #{palayer_forward.1} parent=5 // pred_check_branch
      %478 = sbr.rel (%p476) target = $region48
    $region47: #{palayer_forward.1} parent=5 // pred_region
      %s479 = ssub.s32 %s13, 2
      // Predicated region
      $region49: #{palayer_forward.1} parent=47 // pred_check
        %p480 = pneg %p168
      $region50: #{palayer_forward.1} parent=47 // pred_check_branch
        %482 = sbr.rel (%p480) target = $region52
      $region51: #{palayer_forward.1} parent=47 // pred_region
        %s483 = smul.u32 2, %s25
        %p484 = scmp.lt.s32.totalorder %s24, 1
        %s485 = scalar_select %p484, %s24, 1
        %p486 = scmp.lt.s32.totalorder %s483, 1
        %s487 = scalar_select %p486, %s483, 1
        %s488 = smul.addr %s485, 16
        %s489 = sadd.s32 %s487, %s488
        %s490 = smul.addr %s489, 8
        %s491 = scalar_lea.vmem %s5, %s490
      $region52: #{palayer_forward.1} parent=47 // pred_fallthru
        _
    $region48: #{palayer_forward.1} parent=5 // pred_fallthru
      _
  $region6: #{palayer_forward.1} parent=0 // loop_footer
    %s17 = sadd.s32 1, %s13
  $region7: #{palayer_forward.1} parent=0 // loop_footer_branch
    %12 = sbr.rel target = $region3
  $region8: #{palayer_forward.1} parent=0 // loop_exit
    _

</llo_original>
